<compile_context>
chip_gen: v5e
topology: v5e:2x2
jax: 0.10.0
libtpu: 0.0.40
codegen_flags: <defaults>
</compile_context>

<pallas_src>
import functools

import jax
import jax.numpy as jnp
import numpy as np
from jax.experimental import pallas as pl
from jax.experimental.pallas import tpu as pltpu


def _round_up(v, mult):
    return ((v + mult - 1) // mult) * mult


def _admsoftmax_kernel(labels_ref, x_ref, wt_ref, out_ref, tgt_acc, excl_acc,
                       *, s, m, valid_n, n_classes, tile_n, tile_c, mask_cols):
    i = pl.program_id(0)          # batch tile (parallel)
    c = pl.program_id(1)          # class tile (reduction / "arbitrary")

    @pl.when(c == 0)
    def _init():
        tgt_acc[...] = jnp.zeros_like(tgt_acc)
        excl_acc[...] = jnp.zeros_like(excl_acc)

    x = x_ref[...]                                  # (TN, D) f32
    labels = labels_ref[...]                        # (TN, 1) int32

    # F.normalize(x, dim=1) (eps=1e-12) with the logit scale s folded in, so the
    # matmul output below is already s * <x_hat, w_j> (no (TN, C) rescale needed).
    sq = jnp.sum(x * x, axis=1, keepdims=True)
    x_n = (x * (s * jax.lax.rsqrt(jnp.maximum(sq, 1e-24)))).astype(jnp.bfloat16)

    # (TN, TC) scaled logits for this class block: bf16 MXU operands, f32 accumulate.
    wf = jnp.dot(x_n, wt_ref[...], preferred_element_type=jnp.float32)

    # Class ids of this block as a (1, TC) lane iota; == broadcasts against (TN, 1).
    col_ids = jax.lax.broadcasted_iota(jnp.int32, (1, tile_c), 1) + c * tile_c
    is_target = col_ids == labels                   # (TN, TC)

    # TODO(synk): like the naive PyTorch reference, no max-subtraction (LSE) before
    # exp; logits with s*wf > ~88 would overflow f32 exp (W is left unnormalized).
    exp_all = jnp.exp(wf)
    excl_mask = is_target
    if mask_cols:  # static: only when the class axis was zero-padded
        excl_mask = jnp.logical_or(excl_mask, col_ids >= n_classes)
    excl_acc[...] += jnp.sum(jnp.where(excl_mask, 0.0, exp_all),
                             axis=1, keepdims=True)
    tgt_acc[...] += jnp.sum(jnp.where(is_target, wf, 0.0),
                            axis=1, keepdims=True)

    @pl.when(c == pl.num_programs(1) - 1)
    def _finalize():
        numerator = tgt_acc[...] - s * m            # = s * (wf[i, y_i] - m)
        denominator = jnp.exp(numerator) + excl_acc[...]
        L = numerator - jnp.log(denominator)        # (TN, 1)
        row_ids = jax.lax.broadcasted_iota(jnp.int32, (tile_n, 1), 0) + i * tile_n
        L = jnp.where(row_ids < valid_n, L, 0.0)    # zero padded rows
        out_ref[0] = -jnp.sum(L, axis=0, keepdims=True)   # (1, 1) per-tile partial sum


def _select_tiling(N, D, C):
    """Pick (tile_n, tile_c, c_pad, c_tiles, vmem_limit) for this TPU generation."""
    try:
        vmem_cap = int(pltpu.get_tpu_info().vmem_capacity_bytes)
    except Exception:
        vmem_cap = 64 * 1024 * 1024          # conservative (v7x-sized) fallback
    vmem_budget = int(vmem_cap * 0.85)       # leave headroom for compiler scratch

    # Class tiling: keep the whole class axis if small, else stream 2048-lane
    # blocks along an inner "arbitrary" grid axis (double-buffered).
    tile_c_max = 2048
    if C <= tile_c_max:
        tile_c, c_pad = C, C
    else:
        tile_c = tile_c_max
        c_pad = _round_up(C, tile_c)
    c_tiles = c_pad // tile_c
    wt_bufs = 1 if c_tiles == 1 else 2       # resident weight -> single buffer

    def est_bytes(tn):
        return (2 * tn * (D + 3) * 4               # x + labels (2 bufs) + loss scratch
                + wt_bufs * D * tile_c * 2         # bf16 weight block(s)
                + 4 * tn * tile_c * 4)             # wf / exp / select temporaries

    n_cap = _round_up(N, 8)
    tile_n = None
    for cand in (512, 384, 256, 128):              # lane multiples keep the MXU fed
        t = min(cand, n_cap)
        if est_bytes(t) <= vmem_budget:
            tile_n = t
            break
    if tile_n is None:
        tile_n = min(128, n_cap)
    tile_n = max(8, _round_up(tile_n, 8))

    vmem_limit = int(min(max(2 * est_bytes(tile_n), 32 * 1024 * 1024), vmem_budget))
    return tile_n, tile_c, c_pad, c_tiles, vmem_limit


def admsoftmax_loss(x, labels, w, *, s=30.0, m=0.4):
    """x: (N, D) float32, labels: (N,) int, w: (C, D) float32 -> scalar loss."""
    N, D = x.shape
    C, Dw = w.shape
    assert D == Dw

    tile_n, tile_c, c_pad, c_tiles, vmem_limit = _select_tiling(N, D, C)

    n_pad = _round_up(N, tile_n)
    n_tiles = n_pad // tile_n

    x_p = x if n_pad == N else jnp.pad(x, ((0, n_pad - N), (0, 0)))
    labels2d = labels.astype(jnp.int32).reshape(N, 1)
    if n_pad != N:
        # padded rows get label -1 (never matches a class) and are masked in-kernel
        labels2d = jnp.pad(labels2d, ((0, n_pad - N), (0, 0)), constant_values=-1)

    # Pre-transpose + bf16-cast the weight once: (D, C_pad), class dim lane-dense.
    wt = jnp.transpose(w).astype(jnp.bfloat16)
    if c_pad != C:
        wt = jnp.pad(wt, ((0, 0), (0, c_pad - C)))

    kernel = functools.partial(
        _admsoftmax_kernel, s=float(s), m=float(m), valid_n=int(N),
        n_classes=int(C), tile_n=int(tile_n), tile_c=int(tile_c),
        mask_cols=bool(c_pad != C))

    if c_tiles == 1:
        # constant index_map -> default double-buffer is pure waste; single buffer.
        wt_spec = pl.BlockSpec((D, tile_c), lambda i, c: (0, c),
                               pipeline_mode=pl.Buffered(buffer_count=1))
    else:
        wt_spec = pl.BlockSpec((D, tile_c), lambda i, c: (0, c))

    per_tile = pl.pallas_call(
        kernel,
        out_shape=jax.ShapeDtypeStruct((n_tiles, 1, 1), jnp.float32),
        grid_spec=pltpu.PrefetchScalarGridSpec(
            num_scalar_prefetch=0,
            grid=(n_tiles, c_tiles),
            in_specs=[
                pl.BlockSpec((tile_n, 1), lambda i, c: (i, 0)),   # labels (held per i)
                pl.BlockSpec((tile_n, D), lambda i, c: (i, 0)),   # x      (held per i)
                wt_spec,                                          # W^T    (streamed over c)
            ],
            out_specs=pl.BlockSpec((1, 1, 1), lambda i, c: (i, 0, 0)),
            scratch_shapes=[pltpu.VMEM((tile_n, 1), jnp.float32),   # s*target_logit acc
                            pltpu.VMEM((tile_n, 1), jnp.float32)],  # excl exp-sum acc
        ),
        compiler_params=pltpu.CompilerParams(
            dimension_semantics=("parallel", "arbitrary"),
            vmem_limit_bytes=vmem_limit,
        ),
    )(labels2d, x_p, wt)

    # padded tiles/rows contribute exactly 0; mean over the true batch
    return jnp.sum(per_tile) / float(N)


def reference_loss(x, labels, w, *, s=30.0, m=0.4):
    xn = x / jnp.maximum(jnp.linalg.norm(x, axis=1, keepdims=True), 1e-12)
    wf = xn @ w.T
    tgt = wf[jnp.arange(x.shape[0]), labels]
    numerator = s * (tgt - m)
    onehot = jax.nn.one_hot(labels, w.shape[0], dtype=jnp.bool_)
    excl = jnp.sum(jnp.where(onehot, 0.0, jnp.exp(s * wf)), axis=1)
    denominator = jnp.exp(numerator) + excl
    L = numerator - jnp.log(denominator)
    return -jnp.mean(L)


if __name__ == "__main__":
    # small shapes consistent with the module: batch=8, in_features=32, out_features=16
    N, D, C = 8, 32, 16
    s_, m_ = 30.0, 0.4

    key = jax.random.PRNGKey(0)
    kx, kw, kl = jax.random.split(key, 3)
    x = jax.random.normal(kx, (N, D), dtype=jnp.float32)
    # deterministic init mimicking nn.Linear default: U(-1/sqrt(D), 1/sqrt(D))
    bound = 1.0 / np.sqrt(D)
    w = jax.random.uniform(kw, (C, D), dtype=jnp.float32, minval=-bound, maxval=bound)
    labels = jax.random.randint(kl, (N,), 0, C, dtype=jnp.int32)

    loss = admsoftmax_loss(x, labels, w, s=s_, m=m_)
    loss = jax.block_until_ready(loss)

    ref = jax.block_until_ready(reference_loss(x, labels, w, s=s_, m=m_))
    np.testing.assert_allclose(np.asarray(loss), np.asarray(ref), rtol=5e-3, atol=1e-2)

    print("KERNEL_OK")
</pallas_src>

<mosaic_0001>
module attributes {stable_mosaic.version = 11 : i64} {
  func.func @_admsoftmax_kernel(%arg0: i32, %arg1: i32, %arg2: memref<8x1xi32, #tpu.memory_space<vmem>>, %arg3: memref<8x32xf32, #tpu.memory_space<vmem>>, %arg4: memref<32x16xbf16, #tpu.memory_space<vmem>>, %arg5: memref<1x1x1xf32, #tpu.memory_space<vmem>>, %arg6: memref<8x1xf32, #tpu.memory_space<vmem>>, %arg7: memref<8x1xf32, #tpu.memory_space<vmem>>) attributes {dimension_semantics = [#tpu.dimension_semantics<parallel>, #tpu.dimension_semantics<arbitrary>], iteration_bounds = array<i64: 1, 1>, scalar_prefetch = 0 : i64, scratch_operands = 2 : i64, tpu.core_type = #tpu.core_type<tc>, window_params = [{transform_indices = @transform_0, window_bounds = array<i64: 8, 1>}, {transform_indices = @transform_1, window_bounds = array<i64: 8, 32>}, {pipeline_mode = #tpu.pipeline_mode<synchronous>, transform_indices = @transform_2, window_bounds = array<i64: 32, 16>}, {transform_indices = @transform_3, window_bounds = array<i64: 1, 1, 1>}]} {
    %c0_i32 = arith.constant 0 : i32
    %0 = arith.cmpi eq, %arg1, %c0_i32 : i32
    %1 = arith.extui %0 : i1 to i32
    %c0_i32_0 = arith.constant 0 : i32
    %2 = arith.cmpi ne, %1, %c0_i32_0 : i32
    scf.if %2 {
      %cst_23 = arith.constant 0.000000e+00 : f32
      %43 = vector.broadcast %cst_23 : f32 to vector<8x1xf32>
      %c0_24 = arith.constant 0 : index
      %c0_25 = arith.constant 0 : index
      %44 = vector.load %arg6[%c0_24, %c0_25] : memref<8x1xf32, #tpu.memory_space<vmem>>, vector<8x1xf32>
      tpu.vector_store %arg6[%c0_24, %c0_25], %43 {strides = array<i32>} : memref<8x1xf32, #tpu.memory_space<vmem>>, vector<8x1xf32>,
      %cst_26 = arith.constant 0.000000e+00 : f32
      %45 = vector.broadcast %cst_26 : f32 to vector<8x1xf32>
      %c0_27 = arith.constant 0 : index
      %c0_28 = arith.constant 0 : index
      %46 = vector.load %arg7[%c0_27, %c0_28] : memref<8x1xf32, #tpu.memory_space<vmem>>, vector<8x1xf32>
      tpu.vector_store %arg7[%c0_27, %c0_28], %45 {strides = array<i32>} : memref<8x1xf32, #tpu.memory_space<vmem>>, vector<8x1xf32>,
    } else {
    }
    %c0 = arith.constant 0 : index
    %c0_1 = arith.constant 0 : index
    %3 = vector.load %arg3[%c0, %c0_1] : memref<8x32xf32, #tpu.memory_space<vmem>>, vector<8x32xf32>
    %c0_2 = arith.constant 0 : index
    %c0_3 = arith.constant 0 : index
    %4 = vector.load %arg2[%c0_2, %c0_3] : memref<8x1xi32, #tpu.memory_space<vmem>>, vector<8x1xi32>
    %5 = arith.mulf %3, %3 : vector<8x32xf32>
    %cst = arith.constant dense<0.000000e+00> : vector<8xf32>
    %6 = vector.multi_reduction <add>, %5, %cst [1] : vector<8x32xf32> to vector<8xf32>
    %7 = vector.shape_cast %6 : vector<8xf32> to vector<8x1xf32>
    %cst_4 = arith.constant 1.000000e-24 : f32
    %8 = vector.broadcast %cst_4 : f32 to vector<8x1xf32>
    %9 = arith.maximumf %7, %8 : vector<8x1xf32>
    %10 = math.rsqrt %9 : vector<8x1xf32>
    %cst_5 = arith.constant 3.000000e+01 : f32
    %11 = vector.broadcast %cst_5 : f32 to vector<8x1xf32>
    %12 = arith.mulf %11, %10 : vector<8x1xf32>
    %13 = vector.broadcast %12 : vector<8x1xf32> to vector<8x32xf32>
    %14 = arith.mulf %3, %13 : vector<8x32xf32>
    %15 = arith.truncf %14 : vector<8x32xf32> to vector<8x32xbf16>
    %c0_6 = arith.constant 0 : index
    %c0_7 = arith.constant 0 : index
    %16 = vector.load %arg4[%c0_6, %c0_7] : memref<32x16xbf16, #tpu.memory_space<vmem>>, vector<32x16xbf16>
    %cst_8 = arith.constant dense<0.000000e+00> : vector<8x16xf32>
    %17 = tpu.matmul %15, %16, %cst_8 {dimension_numbers = #tpu.dot_dimension_numbers<[1], [0], [0], [1], [0, 0, 1, 1], [], []>} : vector<8x32xbf16>, vector<32x16xbf16>, vector<8x16xf32> -> vector<8x16xf32>
    %18 = tpu.iota {dimensions = array<i32: 1>} : vector<1x16xi32>
    %c16_i32 = arith.constant 16 : i32
    %19 = arith.muli %arg1, %c16_i32 : i32
    %20 = vector.broadcast %19 : i32 to vector<1x16xi32>
    %21 = arith.addi %18, %20 : vector<1x16xi32>
    %22 = vector.broadcast %21 : vector<1x16xi32> to vector<8x16xi32>
    %23 = vector.broadcast %4 : vector<8x1xi32> to vector<8x16xi32>
    %24 = arith.cmpi eq, %22, %23 : vector<8x16xi32>
    %25 = math.exp %17 : vector<8x16xf32>
    %c0_9 = arith.constant 0 : index
    %c0_10 = arith.constant 0 : index
    %26 = vector.load %arg7[%c0_9, %c0_10] : memref<8x1xf32, #tpu.memory_space<vmem>>, vector<8x1xf32>
    %cst_11 = arith.constant 0.000000e+00 : f32
    %27 = vector.broadcast %cst_11 : f32 to vector<8x16xf32>
    %28 = arith.select %24, %27, %25 : vector<8x16xi1>, vector<8x16xf32>
    %cst_12 = arith.constant dense<0.000000e+00> : vector<8xf32>
    %29 = vector.multi_reduction <add>, %28, %cst_12 [1] : vector<8x16xf32> to vector<8xf32>
    %30 = vector.shape_cast %29 : vector<8xf32> to vector<8x1xf32>
    %31 = arith.addf %26, %30 : vector<8x1xf32>
    %c0_13 = arith.constant 0 : index
    %c0_14 = arith.constant 0 : index
    %32 = vector.load %arg7[%c0_13, %c0_14] : memref<8x1xf32, #tpu.memory_space<vmem>>, vector<8x1xf32>
    tpu.vector_store %arg7[%c0_13, %c0_14], %31 {strides = array<i32>} : memref<8x1xf32, #tpu.memory_space<vmem>>, vector<8x1xf32>,
    %c0_15 = arith.constant 0 : index
    %c0_16 = arith.constant 0 : index
    %33 = vector.load %arg6[%c0_15, %c0_16] : memref<8x1xf32, #tpu.memory_space<vmem>>, vector<8x1xf32>
    %cst_17 = arith.constant 0.000000e+00 : f32
    %34 = vector.broadcast %cst_17 : f32 to vector<8x16xf32>
    %35 = arith.select %24, %17, %34 : vector<8x16xi1>, vector<8x16xf32>
    %cst_18 = arith.constant dense<0.000000e+00> : vector<8xf32>
    %36 = vector.multi_reduction <add>, %35, %cst_18 [1] : vector<8x16xf32> to vector<8xf32>
    %37 = vector.shape_cast %36 : vector<8xf32> to vector<8x1xf32>
    %38 = arith.addf %33, %37 : vector<8x1xf32>
    %c0_19 = arith.constant 0 : index
    %c0_20 = arith.constant 0 : index
    %39 = vector.load %arg6[%c0_19, %c0_20] : memref<8x1xf32, #tpu.memory_space<vmem>>, vector<8x1xf32>
    tpu.vector_store %arg6[%c0_19, %c0_20], %38 {strides = array<i32>} : memref<8x1xf32, #tpu.memory_space<vmem>>, vector<8x1xf32>,
    %c0_i32_21 = arith.constant 0 : i32
    %40 = arith.cmpi eq, %arg1, %c0_i32_21 : i32
    %41 = arith.extui %40 : i1 to i32
    %c0_i32_22 = arith.constant 0 : i32
    %42 = arith.cmpi ne, %41, %c0_i32_22 : i32
    scf.if %42 {
      %c0_23 = arith.constant 0 : index
      %c0_24 = arith.constant 0 : index
      %43 = vector.load %arg6[%c0_23, %c0_24] : memref<8x1xf32, #tpu.memory_space<vmem>>, vector<8x1xf32>
      %cst_25 = arith.constant 1.200000e+01 : f32
      %44 = vector.broadcast %cst_25 : f32 to vector<8x1xf32>
      %45 = arith.subf %43, %44 : vector<8x1xf32>
      %46 = math.exp %45 : vector<8x1xf32>
      %c0_26 = arith.constant 0 : index
      %c0_27 = arith.constant 0 : index
      %47 = vector.load %arg7[%c0_26, %c0_27] : memref<8x1xf32, #tpu.memory_space<vmem>>, vector<8x1xf32>
      %48 = arith.addf %46, %47 : vector<8x1xf32>
      %49 = math.log %48 : vector<8x1xf32>
      %50 = arith.subf %45, %49 : vector<8x1xf32>
      %51 = tpu.iota {dimensions = array<i32: 0>} : vector<8x1xi32>
      %c8_i32 = arith.constant 8 : i32
      %52 = arith.muli %arg0, %c8_i32 : i32
      %53 = vector.broadcast %52 : i32 to vector<8x1xi32>
      %54 = arith.addi %51, %53 : vector<8x1xi32>
      %c8_i32_28 = arith.constant 8 : i32
      %55 = vector.broadcast %c8_i32_28 : i32 to vector<8x1xi32>
      %56 = arith.cmpi slt, %54, %55 : vector<8x1xi32>
      %cst_29 = arith.constant 0.000000e+00 : f32
      %57 = vector.broadcast %cst_29 : f32 to vector<8x1xf32>
      %58 = arith.select %56, %50, %57 : vector<8x1xi1>, vector<8x1xf32>
      %cst_30 = arith.constant dense<0.000000e+00> : vector<1xf32>
      %59 = vector.multi_reduction <add>, %58, %cst_30 [0] : vector<8x1xf32> to vector<1xf32>
      %60 = vector.shape_cast %59 : vector<1xf32> to vector<1x1xf32>
      %cst_31 = arith.constant 0.000000e+00 : f32
      %61 = vector.broadcast %cst_31 : f32 to vector<1x1xf32>
      %62 = arith.subf %61, %60 : vector<1x1xf32>
      %c0_32 = arith.constant 0 : index
      %c0_33 = arith.constant 0 : index
      %c0_34 = arith.constant 0 : index
      %63 = vector.load %arg5[%c0_32, %c0_33, %c0_34] : memref<1x1x1xf32, #tpu.memory_space<vmem>>, vector<1x1x1xf32>
      %64 = vector.shape_cast %63 : vector<1x1x1xf32> to vector<1x1xf32>
      %65 = vector.shape_cast %62 : vector<1x1xf32> to vector<1x1x1xf32>
      tpu.vector_store %arg5[%c0_32, %c0_33, %c0_34], %65 {strides = array<i32>} : memref<1x1x1xf32, #tpu.memory_space<vmem>>, vector<1x1x1xf32>,
    } else {
    }
    return
  }
  func.func @transform_0(%arg0: i32, %arg1: i32) -> (i32, i32) {
    %c0_i32 = arith.constant 0 : i32
    %c0_i32_0 = arith.constant 0 : i32
    return %arg0, %c0_i32 : i32, i32
  }
  func.func @transform_1(%arg0: i32, %arg1: i32) -> (i32, i32) {
    %c0_i32 = arith.constant 0 : i32
    %c0_i32_0 = arith.constant 0 : i32
    return %arg0, %c0_i32 : i32, i32
  }
  func.func @transform_2(%arg0: i32, %arg1: i32) -> (i32, i32) {
    %c0_i32 = arith.constant 0 : i32
    %c0_i32_0 = arith.constant 0 : i32
    return %c0_i32, %arg1 : i32, i32
  }
  func.func @transform_3(%arg0: i32, %arg1: i32) -> (i32, i32, i32) {
    %c0_i32 = arith.constant 0 : i32
    %c0_i32_0 = arith.constant 0 : i32
    %c0_i32_1 = arith.constant 0 : i32
    return %arg0, %c0_i32, %c0_i32_0 : i32, i32, i32
  }
}

</mosaic_0001>

<llo_original>
// kernel: tpu_custom_call.1
$region0: #{tpu_custom_call.1}
  #allocation0 [shape = 'u32[]', space=smem, size = 0x4, offset = 0x4, fixed_abs, tag = 'smem constant byte address 0x4 - core index']
  #allocation1 [shape = 'u32[72,128]{1,0:T(1,128)}', space=vmem, size = 0x9000, scoped, tag = 'internal scratch']
  #allocation2 [shape = 'f32[8,1]{1,0:T(8,128)}', space=vmem, size = 0x1000, scoped, tag = 'scratch operand']
  #allocation3 [shape = 'f32[8,1]{1,0:T(8,128)}', space=vmem, size = 0x1000, scoped, tag = 'scratch operand']
  %s0 = inlined_call_operand.vmem [shape: s32[8,1], index: 0, kind: input, shape index: {}]
  %s1 = inlined_call_operand.vmem [shape: f32[8,32], index: 1, kind: input, shape index: {}]
  %s2 = inlined_call_operand.vmem [shape: bf16[32,16], index: 2, kind: input, shape index: {}]
  %s3 = inlined_call_operand.hbm [shape: f32[1,1,1], index: 3, kind: output, shape index: {}]
  %s4 = sld [smem:[#allocation0]]
  $region30: #{tpu_custom_call.1} parent=0
    _
  %s6 = ssub.s32 1, %s4
  %s7 = scalar_select 0, %s6, %s4
  $region1: #{tpu_custom_call.1} parent=0
    #allocation4 [shape = 'u8[512]{0}', space=vmem, size = 0x400, scoped, tag = 'output window, operand 0, single buffered']
    #allocation5 [shape = 's32[1]{0}', space=sflag, size = 0x4, scoped, tag = 'scoped memory for tpu_custom_call.1']
    %8 = vsyncpa [#allocation5], 0
    // Predicated region
    $region2: #{tpu_custom_call.1} parent=1 // pred_check
      _
    $region3: #{tpu_custom_call.1} parent=1 // pred_check_branch
      %10 = sbr.rel (0) target = $region5
    $region4: #{tpu_custom_call.1} parent=1 // pred_region
      _
    $region5: #{tpu_custom_call.1} parent=1 // pred_fallthru
      _
    // Predicated region
    $region6: #{tpu_custom_call.1} parent=1 // pred_check
      _
    $region7: #{tpu_custom_call.1} parent=1 // pred_check_branch
      %12 = sbr.rel (0) target = $region9
    $region8: #{tpu_custom_call.1} parent=1 // pred_region
      _
    $region9: #{tpu_custom_call.1} parent=1 // pred_fallthru
      _
    // Predicated region
    $region10: #{tpu_custom_call.1} parent=1 // pred_check
      _
    $region11: #{tpu_custom_call.1} parent=1 // pred_check_branch
      %14 = sbr.rel (0) target = $region13
    $region12: #{tpu_custom_call.1} parent=1 // pred_region
      _
    $region13: #{tpu_custom_call.1} parent=1 // pred_fallthru
      _
    %p16 = scmp.eq.s32.totalorder 0, 0
    // Predicated region
    $region14: #{tpu_custom_call.1} parent=1 // pred_check
      %p17 = pneg %p16
    $region15: #{tpu_custom_call.1} parent=1 // pred_check_branch
      %19 = sbr.rel (%p17) target = $region17
    $region16: #{tpu_custom_call.1} parent=1 // pred_region
      %vm20 = vcmask 7168
      %21 = vst.msk [vmem:[#allocation2] sm:$0xff] %vm20, 0.0
      %22 = vst.msk [vmem:[#allocation3] sm:$0xff] %vm20, 0.0
    $region17: #{tpu_custom_call.1} parent=1 // pred_fallthru
      _
    %v23 = vld [vmem:[%s1] sm:$0xff]
    %v24 = vld [vmem:[%s0] sm:$0xff]
    %v25 = vmul.f32 %v23, %v23
    %vm26 = vcmask 261120
    %v27 = vsel %vm26, %v25, 0.0
    %28 = vadd.xlane.f32.xlu0 %v27
    %v29 = vpop.xlane.xlu0 %28
    %v30 = vmax.f32 %v29, 1e-24
    %v31 = vrsqrt.pop %v30
    %v32 = vmul.f32 %v31, %v30
    %v33 = vmul.f32 %v32, %v31
    %v34 = vmul.f32 0.5, %v33
    %v35 = vsub.f32 1.5, %v34
    %v36 = vmul.f32 %v31, %v35
    %vm37 = vweird.f32 %v30
    %vm38 = vweird.f32 %v31
    %vm39 = vmor %vm37, %vm38
    %v40 = vsel %vm39, %v31, %v36
    %v41 = vmul.f32 %v40, 30.0
    %v42 = vmul.f32 %v23, %v41
    %v43 = vpack.c.bf16 %v42, %v42
    %v44 = vld [vmem:[%s2] sm:$0xf]
    %v45 = vld [vmem:[%s2 + $0x4] sm:$0xf]
    %v46 = vld [vmem:[%s2 + $0x8] sm:$0xf]
    %v47 = vld [vmem:[%s2 + $0xc] sm:$0xf]
    %v52 = vunpack.c.l.b16 %v44
    %v53 = vunpack.c.l.b16 %v45
    %v54 = vunpack.c.l.b16 %v46
    %v55 = vunpack.c.l.b16 %v47
    %v56 = vpack.c.b16 %v53, %v52
    %v57 = vpack.c.b16 %v55, %v54
    %v61 = vsel %vm26, %v43, 0
    %63 = vmatpush.bf16.msra.mxu0 0
    %64 = vmatpush.bf16.msra.mxu0 0
    %65 = vmatpush.bf16.msra.mxu0 0
    %66 = vmatpush.bf16.msra.mxu0 0
    %67 = vmatpush.bf16.msra.mxu0 0
    %68 = vmatpush.bf16.msra.mxu0 0
    %69 = vmatpush.bf16.msra.mxu0 %v57
    %70 = vmatpush.bf16.msra.mxu0 %v56
    %71 = vmatmul.bf16.gmra.mxu0 %v61
    %v72 = vpop.f32.mrf.mxu0
    %v73 = vadd.f32 0.0, %v72
    %v74 = vpop.f32.mrf.mxu0
    %75 = vdwg.mxu0
    %v76 = vlaneseq
    %v77 = vand.u32 %v76, 127
    %s78 = smul.u32 0, 16
    %v79 = vstv %s78
    %v80 = vadd.s32 %v77, %v79
    %81 = vset.pattern.permute.xlu0 0
    %82 = vperm.xlu0 %81, %v24
    %v83 = vpop.permute.xlu0 %82
    %vm84 = vcmp.eq.s32.totalorder %v80, %v83
    %v85 = vmul.f32 %v73, 1.442695
    %v86 = vpow.pop %v85
    %v87 = vld [vmem:[#allocation3] sm:$0xff]
    %v88 = vsel %vm84, 0.0, %v86
    %vm89 = vcmask 130048
    %v90 = vsel %vm89, %v88, 0.0
    %91 = vadd.xlane.f32.xlu0 %v90
    %v92 = vpop.xlane.xlu0 %91
    %v93 = vadd.f32 %v87, %v92
    %vm94 = vcmask 7168
    %95 = vst.msk [vmem:[#allocation3] sm:$0xff] %vm94, %v93
    %v96 = vld [vmem:[#allocation2] sm:$0xff]
    %v97 = vsel %vm84, %v73, 0.0
    %v98 = vsel %vm89, %v97, 0.0
    %99 = vadd.xlane.f32.xlu0 %v98
    %v100 = vpop.xlane.xlu0 %99
    %v101 = vadd.f32 %v96, %v100
    %102 = vst.msk [vmem:[#allocation2] sm:$0xff] %vm94, %v101
    // Predicated region
    $region18: #{tpu_custom_call.1} parent=1 // pred_check
      %p103 = pneg %p16
    $region19: #{tpu_custom_call.1} parent=1 // pred_check_branch
      %105 = sbr.rel (%p103) target = $region21
    $region20: #{tpu_custom_call.1} parent=1 // pred_region
      %v106 = vld [vmem:[#allocation2] sm:$0xff]
      %v107 = vsub.f32 %v106, 12.0
      %v108 = vmul.f32 %v107, 1.442695
      %v109 = vpow.pop %v108
      %v110 = vld [vmem:[#allocation3] sm:$0xff]
      %v111 = vadd.f32 %v109, %v110
      %v112 = vlog2.pop %v111
      %v113 = vmul.f32 %v112, 0.6931472
      %v114 = vsub.f32 %v107, %v113
      %v115 = vlaneseq
      %v116 = vshrl.u32 %v115, 7
      %s117 = smul.u32 0, 8
      %v118 = vstv %s117
      %v119 = vadd.s32 %v116, %v118
      %vm120 = vcmp.lt.s32.totalorder %v119, 8
      %v121 = vsel %vm120, %v114, 0.0
      %v122 = vsel %vm94, %v121, 0.0
      %v123 = vrot.slane %v122, 4
      %v124 = vadd.f32 %v122, %v123
      %v125 = vrot.slane %v124, 2
      %v126 = vadd.f32 %v124, %v125
      %v127 = vrot.slane %v126, 1
      %v128 = vadd.f32 %v126, %v127
      %v129 = vsub.f32 0.0, %v128
      %vm130 = vcmask 0
      %131 = vst.msk [vmem:[#allocation4] sm:$0x1] %vm130, %v129
    $region21: #{tpu_custom_call.1} parent=1 // pred_fallthru
      _
    // Predicated region
    $region22: #{tpu_custom_call.1} parent=1 // pred_check
      _
    $region23: #{tpu_custom_call.1} parent=1 // pred_check_branch
      %133 = sbr.rel (0) target = $region25
    $region24: #{tpu_custom_call.1} parent=1 // pred_region
      %135 = vsyncadd [#allocation5], 0
      %s137 = sshll.u32 [#allocation4], 4
      %s138 = int_to_ptr.vmem [resolvable:$true] %s137
      %s139 = sshll.u32 %s3, 4
      %s140 = int_to_ptr.hbm [resolvable:$true] %s139
      %142 = dma.vmem_to_hbm [thread:$0]  %s138, 16, %s140, [#allocation5]
    $region25: #{tpu_custom_call.1} parent=1 // pred_fallthru
      _
    // Predicated region
    $region26: #{tpu_custom_call.1} parent=1 // pred_check
      _
    $region27: #{tpu_custom_call.1} parent=1 // pred_check_branch
      %144 = sbr.rel (0) target = $region29
    $region28: #{tpu_custom_call.1} parent=1 // pred_region
      %146 = dma.done [#allocation5], 16
    $region29: #{tpu_custom_call.1} parent=1 // pred_fallthru
      _
    %147 = vsyncpa [#allocation5], 1

</llo_original>
